<compile_context>
chip_gen: v7x
topology: tpu7x:2x2x1
jax: 0.10.0
libtpu: 0.0.40
codegen_flags: <defaults>
</compile_context>

<pallas_src>
import jax
import jax.numpy as jnp
from jax import lax
from jax.experimental import pallas as pl
from jax.experimental.pallas import tpu as pltpu


def _make_focal_loss_kernel(gamma: float):
    gamma = float(gamma)
    g_int = int(gamma)
    int_gamma = (float(g_int) == gamma) and (0 <= g_int <= 16)

    def kernel(logits_ref, pw_ref, out_ref, acc_ref):
        i = pl.program_id(1)

        @pl.when(i == 0)
        def _init():
            acc_ref[...] = jnp.zeros_like(acc_ref)

        logits = logits_ref[...]                                # (TN, Cp) native dtype
        # Row max in the native dtype (exact; bf16 halves the reduce work on
        # v6e/v7x), then a single promotion to f32 for the exp/log path.
        # (Keeping exp in f32 preserves agreement with the f32 reference.)
        m = jnp.max(logits, axis=-1, keepdims=True)             # (TN, 1)
        z = logits.astype(jnp.float32) - m.astype(jnp.float32)  # (TN, Cp) f32
        s = jnp.sum(jnp.exp(z), axis=-1, keepdims=True)         # (TN, 1)
        lse = jnp.log(s) + m.astype(jnp.float32)                # full log-sum-exp

        # Packed per-sample side input: lane 0 = picked target logit (f32),
        # lane 1 = per-sample class weight (f32).  Extract with a masked 2-lane
        # sum (guaranteed lowering; negligible cost on a (TN, 2) array).
        pw = pw_ref[...]                                        # (TN, 2) f32
        lane = lax.broadcasted_iota(jnp.int32, pw.shape, 1)
        picked = jnp.sum(jnp.where(lane == 0, pw, 0.0), axis=-1, keepdims=True)
        w = jnp.sum(jnp.where(lane == 1, pw, 0.0), axis=-1, keepdims=True)

        # Weighted cross entropy, reduction='none':  -log_softmax(x)[target] * w
        ce = (lse - picked) * w                                 # (TN, 1)

        # Focal modulation: (1 - exp(-ce))**gamma * ce
        p = jnp.exp(-ce)
        one_minus_p = jnp.maximum(1.0 - p, 0.0)   # clamp: avoid (-eps)**gamma NaN
        if int_gamma:
            factor = jnp.ones_like(one_minus_p)
            for _ in range(g_int):                # VPU multiplies, no EUP pow path
                factor = factor * one_minus_p
        else:
            factor = one_minus_p ** jnp.float32(gamma)
        loss = factor * ce                                      # (TN, 1); padded rows == 0

        # Per-tile partial sum into the running accumulator. Cross-tile
        # accumulation is sequential f32; with the large tiles chosen below the
        # tile count stays small, keeping the error far below the 1e-4 tolerance.
        acc_ref[...] += jnp.sum(loss, axis=0, keepdims=True)

        @pl.when(i == pl.num_programs(1) - 1)
        def _finalize():
            out_ref[...] = jnp.broadcast_to(acc_ref[...], out_ref.shape)

    return kernel


def focal_loss_pallas(logits, target, weight=None, gamma=0.0,
                      num_partials=None, tile_bytes=None):
    """logits: (N, C) float (any float dtype), target: (N,) int, weight: (C,) or None."""
    assert gamma >= 0
    N, C = logits.shape
    itemsize = jnp.dtype(logits.dtype).itemsize
    target = target.astype(jnp.int32)

    # ---- per-generation defaults -------------------------------------------
    try:
        kind = jax.devices()[0].device_kind.lower()
    except Exception:  # pragma: no cover - defensive
        kind = ""
    is_v7 = "v7" in kind
    if num_partials is None:
        # Two TensorCores only on v7x; on v5e/v6e a second partial is just a
        # serial outer loop that halves the tile size for nothing.
        num_partials = 2 if is_v7 else 1
    if tile_bytes is None:
        tile_bytes = (6 << 20) if is_v7 else (8 << 20)

    # ---- hoisted gathers (one XLA gather instead of a per-element select +
    #      cross-lane reduce inside the kernel hot loop) ----------------------
    picked = jnp.take_along_axis(logits, target[:, None], axis=-1).astype(jnp.float32)
    if weight is None:
        w_per_sample = jnp.ones((N, 1), jnp.float32)
    else:
        w_per_sample = weight.astype(jnp.float32)[target][:, None]
    pw = jnp.concatenate([picked, w_per_sample], axis=1)        # (N, 2) f32, ONE narrow input

    # ---- class/lane padding with -inf (transparent through max/exp) ---------
    Cp = ((C + 127) // 128) * 128
    if Cp != C:
        logits = jnp.pad(logits, ((0, 0), (0, Cp - C)), constant_values=-jnp.inf)

    # ---- tile sizing with full VMEM accounting -------------------------------
    # Per-row VMEM cost: double-buffered logits rows + double-buffered narrow
    # rows ((tn,2) is lane-padded to 128 lanes of f32 = 512 B/row in VMEM).
    vmem_budget = (44 << 20) if is_v7 else (96 << 20)
    per_row_vmem = 2 * Cp * itemsize + 2 * 128 * 4
    tn_cap = min(tile_bytes // (Cp * itemsize),
                 int(vmem_budget / 1.3) // per_row_vmem,
                 32768)
    tn_cap = max(8, (tn_cap // 8) * 8)
    rows_per_part = -(-N // num_partials)
    rows_per_part_8 = ((rows_per_part + 7) // 8) * 8
    tn = min(tn_cap, rows_per_part_8)
    # TODO(synk): for vocabulary-scale C (where even an 8-row double-buffered
    # tile exceeds the VMEM budget) add a class-chunked online-LSE path with C
    # as the innermost grid axis and running max/sum scratch.

    # ---- batch padding so N splits evenly into partials * tiles * tn --------
    chunk = num_partials * tn
    Np = ((N + chunk - 1) // chunk) * chunk
    tiles_per_part = Np // chunk
    if Np != N:
        pad = Np - N
        logits = jnp.pad(logits, ((0, pad), (0, 0)))            # all-zero rows
        pw = jnp.pad(pw, ((0, pad), (0, 0)))                    # picked=0, weight=0 -> loss 0

    # ---- explicit VMEM limit (double-buffered blocks + headroom) -------------
    logits_block = tn * Cp * itemsize
    narrow_block = tn * 128 * 4
    vmem_limit = int(1.25 * (2 * logits_block + 2 * narrow_block)) + (2 << 20)
    vmem_limit = max(4 << 20, min(vmem_limit, (60 << 20) if is_v7 else (110 << 20)))

    row_map = lambda c, i: (c * tiles_per_part + i, 0)
    kernel = _make_focal_loss_kernel(float(gamma))
    cost = pl.CostEstimate(
        flops=5 * Np * Cp,
        transcendentals=Np * Cp + 2 * Np,
        bytes_accessed=Np * Cp * itemsize + Np * 2 * 4 + num_partials * 8 * 128 * 4)

    def _call(leading_sem):
        return pl.pallas_call(
            kernel,
            out_shape=jax.ShapeDtypeStruct((num_partials * 8, 128), jnp.float32),
            grid=(num_partials, tiles_per_part),
            in_specs=[
                pl.BlockSpec((tn, Cp), row_map),   # logits, native dtype (bf16 ok)
                pl.BlockSpec((tn, 2), row_map),    # packed (picked_logit, weight)
            ],
            out_specs=pl.BlockSpec((8, 128), lambda c, i: (c, 0)),
            scratch_shapes=[pltpu.VMEM((1, 1), jnp.float32)],
            compiler_params=pltpu.CompilerParams(
                dimension_semantics=(leading_sem, pltpu.ARBITRARY),
                vmem_limit_bytes=int(vmem_limit)),
            cost_estimate=cost,
        )(logits, pw)

    if is_v7 and num_partials > 1:
        # Split the two partial sums across v7x's two TensorCores.
        try:
            partials = _call(pltpu.CORE_PARALLEL)
        except Exception:
            partials = _call(pltpu.PARALLEL)
    elif num_partials > 1:
        partials = _call(pltpu.PARALLEL)
    else:
        partials = _call(pltpu.ARBITRARY)

    # Combine the per-core partial sums and take the mean over the ORIGINAL N.
    partial_sums = partials.reshape(num_partials, 8, 128)[:, 0, 0]
    return jnp.sum(partial_sums) / jnp.float32(N)


def focal_loss_ref(logits, target, weight, gamma):
    """Pure-JAX reference of the PyTorch module (compute in f32)."""
    logits = logits.astype(jnp.float32)
    logp = jax.nn.log_softmax(logits, axis=-1)
    picked = jnp.take_along_axis(logp, target[:, None].astype(jnp.int32),
                                 axis=-1)[:, 0]
    w = weight.astype(jnp.float32)[target] if weight is not None else 1.0
    ce = -picked * w
    p = jnp.exp(-ce)
    return jnp.mean((1.0 - p) ** gamma * ce)


if __name__ == "__main__":
    key = jax.random.PRNGKey(0)
    k1, k2, k3, k4 = jax.random.split(key, 4)

    # Case 1: f32 logits, per-class weight, integer gamma (fast VPU power path).
    N, C = 8, 32
    gamma = 2.0
    logits = jax.random.normal(k1, (N, C), dtype=jnp.float32)
    target = jax.random.randint(k2, (N,), 0, C, dtype=jnp.int32)
    weight = jnp.linspace(0.5, 1.5, C, dtype=jnp.float32)

    out = jax.block_until_ready(focal_loss_pallas(logits, target, weight, gamma))
    ref = focal_loss_ref(logits, target, weight, gamma)
    assert jnp.allclose(out, ref, rtol=1e-4, atol=1e-5), (out, ref)

    # Case 2: bf16 logits (half the HBM traffic), no weight, non-integer gamma.
    # Shapes + tiny tile_bytes exercise class padding, row padding and
    # multi-tile accumulation along the reduction axis.
    N2, C2 = 37, 50
    gamma2 = 1.5
    logits2 = jax.random.normal(k3, (N2, C2), dtype=jnp.float32).astype(jnp.bfloat16)
    target2 = jax.random.randint(k4, (N2,), 0, C2, dtype=jnp.int32)

    out2 = jax.block_until_ready(
        focal_loss_pallas(logits2, target2, None, gamma2, tile_bytes=4096))
    ref2 = focal_loss_ref(logits2, target2, None, gamma2)
    assert jnp.allclose(out2, ref2, rtol=1e-4, atol=1e-5), (out2, ref2)

    print("KERNEL_OK")
</pallas_src>

<mosaic_0001>
module attributes {stable_mosaic.version = 11 : i64} {
  func.func @kernel(%arg0: i32, %arg1: i32, %arg2: memref<8x128xf32, #tpu.memory_space<vmem>>, %arg3: memref<8x2xf32, #tpu.memory_space<vmem>>, %arg4: memref<8x128xf32, #tpu.memory_space<vmem>>, %arg5: memref<1x1xf32, #tpu.memory_space<vmem>>) attributes {dimension_semantics = [#tpu.dimension_semantics<arbitrary>, #tpu.dimension_semantics<arbitrary>], iteration_bounds = array<i64: 1, 1>, scalar_prefetch = 0 : i64, scratch_operands = 1 : i64, tpu.core_type = #tpu.core_type<tc>, window_params = [{transform_indices = @transform_0, window_bounds = array<i64: 8, 128>}, {transform_indices = @transform_1, window_bounds = array<i64: 8, 2>}, {transform_indices = @transform_2, window_bounds = array<i64: 8, 128>}]} {
    %c0_i32 = arith.constant 0 : i32
    %0 = arith.cmpi eq, %arg1, %c0_i32 : i32
    %1 = arith.extui %0 : i1 to i32
    %c0_i32_0 = arith.constant 0 : i32
    %2 = arith.cmpi ne, %1, %c0_i32_0 : i32
    scf.if %2 {
      %cst_21 = arith.constant 0.000000e+00 : f32
      %48 = vector.broadcast %cst_21 : f32 to vector<1x1xf32>
      %c0_22 = arith.constant 0 : index
      %c0_23 = arith.constant 0 : index
      %49 = vector.load %arg5[%c0_22, %c0_23] : memref<1x1xf32, #tpu.memory_space<vmem>>, vector<1x1xf32>
      tpu.vector_store %arg5[%c0_22, %c0_23], %48 {strides = array<i32>} : memref<1x1xf32, #tpu.memory_space<vmem>>, vector<1x1xf32>,
    } else {
    }
    %c0 = arith.constant 0 : index
    %c0_1 = arith.constant 0 : index
    %3 = vector.load %arg2[%c0, %c0_1] : memref<8x128xf32, #tpu.memory_space<vmem>>, vector<8x128xf32>
    %cst = arith.constant dense<0xFF800000> : vector<8xf32>
    %4 = vector.multi_reduction <maximumf>, %3, %cst [1] : vector<8x128xf32> to vector<8xf32>
    %5 = vector.shape_cast %4 : vector<8xf32> to vector<8x1xf32>
    %6 = vector.broadcast %5 : vector<8x1xf32> to vector<8x128xf32>
    %7 = arith.subf %3, %6 : vector<8x128xf32>
    %8 = math.exp %7 : vector<8x128xf32>
    %cst_2 = arith.constant dense<0.000000e+00> : vector<8xf32>
    %9 = vector.multi_reduction <add>, %8, %cst_2 [1] : vector<8x128xf32> to vector<8xf32>
    %10 = vector.shape_cast %9 : vector<8xf32> to vector<8x1xf32>
    %11 = math.log %10 : vector<8x1xf32>
    %12 = arith.addf %11, %5 : vector<8x1xf32>
    %c0_3 = arith.constant 0 : index
    %c0_4 = arith.constant 0 : index
    %13 = vector.load %arg3[%c0_3, %c0_4] : memref<8x2xf32, #tpu.memory_space<vmem>>, vector<8x2xf32>
    %14 = tpu.iota {dimensions = array<i32: 1>} : vector<8x2xi32>
    %c0_i32_5 = arith.constant 0 : i32
    %15 = vector.broadcast %c0_i32_5 : i32 to vector<8x2xi32>
    %16 = arith.cmpi eq, %14, %15 : vector<8x2xi32>
    %cst_6 = arith.constant 0.000000e+00 : f32
    %17 = vector.broadcast %cst_6 : f32 to vector<8x2xf32>
    %18 = arith.select %16, %13, %17 : vector<8x2xi1>, vector<8x2xf32>
    %cst_7 = arith.constant dense<0.000000e+00> : vector<8xf32>
    %19 = vector.multi_reduction <add>, %18, %cst_7 [1] : vector<8x2xf32> to vector<8xf32>
    %20 = vector.shape_cast %19 : vector<8xf32> to vector<8x1xf32>
    %c1_i32 = arith.constant 1 : i32
    %21 = vector.broadcast %c1_i32 : i32 to vector<8x2xi32>
    %22 = arith.cmpi eq, %14, %21 : vector<8x2xi32>
    %cst_8 = arith.constant 0.000000e+00 : f32
    %23 = vector.broadcast %cst_8 : f32 to vector<8x2xf32>
    %24 = arith.select %22, %13, %23 : vector<8x2xi1>, vector<8x2xf32>
    %cst_9 = arith.constant dense<0.000000e+00> : vector<8xf32>
    %25 = vector.multi_reduction <add>, %24, %cst_9 [1] : vector<8x2xf32> to vector<8xf32>
    %26 = vector.shape_cast %25 : vector<8xf32> to vector<8x1xf32>
    %27 = arith.subf %12, %20 : vector<8x1xf32>
    %28 = arith.mulf %27, %26 : vector<8x1xf32>
    %cst_10 = arith.constant 0.000000e+00 : f32
    %29 = vector.broadcast %cst_10 : f32 to vector<8x1xf32>
    %30 = arith.subf %29, %28 : vector<8x1xf32>
    %31 = math.exp %30 : vector<8x1xf32>
    %cst_11 = arith.constant 1.000000e+00 : f32
    %32 = vector.broadcast %cst_11 : f32 to vector<8x1xf32>
    %33 = arith.subf %32, %31 : vector<8x1xf32>
    %cst_12 = arith.constant 0.000000e+00 : f32
    %34 = vector.broadcast %cst_12 : f32 to vector<8x1xf32>
    %35 = arith.maximumf %33, %34 : vector<8x1xf32>
    %cst_13 = arith.constant 1.000000e+00 : f32
    %36 = vector.broadcast %cst_13 : f32 to vector<8x1xf32>
    %37 = arith.mulf %36, %35 : vector<8x1xf32>
    %38 = arith.mulf %37, %35 : vector<8x1xf32>
    %39 = arith.mulf %38, %28 : vector<8x1xf32>
    %c0_14 = arith.constant 0 : index
    %c0_15 = arith.constant 0 : index
    %40 = vector.load %arg5[%c0_14, %c0_15] : memref<1x1xf32, #tpu.memory_space<vmem>>, vector<1x1xf32>
    %cst_16 = arith.constant dense<0.000000e+00> : vector<1xf32>
    %41 = vector.multi_reduction <add>, %39, %cst_16 [0] : vector<8x1xf32> to vector<1xf32>
    %42 = vector.shape_cast %41 : vector<1xf32> to vector<1x1xf32>
    %43 = arith.addf %40, %42 : vector<1x1xf32>
    %c0_17 = arith.constant 0 : index
    %c0_18 = arith.constant 0 : index
    %44 = vector.load %arg5[%c0_17, %c0_18] : memref<1x1xf32, #tpu.memory_space<vmem>>, vector<1x1xf32>
    tpu.vector_store %arg5[%c0_17, %c0_18], %43 {strides = array<i32>} : memref<1x1xf32, #tpu.memory_space<vmem>>, vector<1x1xf32>,
    %c0_i32_19 = arith.constant 0 : i32
    %45 = arith.cmpi eq, %arg1, %c0_i32_19 : i32
    %46 = arith.extui %45 : i1 to i32
    %c0_i32_20 = arith.constant 0 : i32
    %47 = arith.cmpi ne, %46, %c0_i32_20 : i32
    scf.if %47 {
      %c0_21 = arith.constant 0 : index
      %c0_22 = arith.constant 0 : index
      %48 = vector.load %arg5[%c0_21, %c0_22] : memref<1x1xf32, #tpu.memory_space<vmem>>, vector<1x1xf32>
      %49 = vector.shape_cast %48 : vector<1x1xf32> to vector<1x1xf32>
      %50 = vector.broadcast %49 : vector<1x1xf32> to vector<8x128xf32>
      %c0_23 = arith.constant 0 : index
      %c0_24 = arith.constant 0 : index
      %51 = vector.load %arg4[%c0_23, %c0_24] : memref<8x128xf32, #tpu.memory_space<vmem>>, vector<8x128xf32>
      tpu.vector_store %arg4[%c0_23, %c0_24], %50 {strides = array<i32>} : memref<8x128xf32, #tpu.memory_space<vmem>>, vector<8x128xf32>,
    } else {
    }
    return
  }
  func.func @transform_0(%arg0: i32, %arg1: i32) -> (i32, i32) {
    %c1_i32 = arith.constant 1 : i32
    %0 = arith.muli %arg0, %c1_i32 : i32
    %1 = arith.addi %0, %arg1 : i32
    %c0_i32 = arith.constant 0 : i32
    %c0_i32_0 = arith.constant 0 : i32
    return %1, %c0_i32 : i32, i32
  }
  func.func @transform_1(%arg0: i32, %arg1: i32) -> (i32, i32) {
    %c1_i32 = arith.constant 1 : i32
    %0 = arith.muli %arg0, %c1_i32 : i32
    %1 = arith.addi %0, %arg1 : i32
    %c0_i32 = arith.constant 0 : i32
    %c0_i32_0 = arith.constant 0 : i32
    return %1, %c0_i32 : i32, i32
  }
  func.func @transform_2(%arg0: i32, %arg1: i32) -> (i32, i32) {
    %c0_i32 = arith.constant 0 : i32
    %c0_i32_0 = arith.constant 0 : i32
    return %arg0, %c0_i32 : i32, i32
  }
}

</mosaic_0001>

<llo_original>
// kernel: tpu_custom_call.1
$region0: #{tpu_custom_call.1}
  #allocation0 [shape = 'u32[]', space=smem, size = 0x4, offset = 0x4, fixed_abs, tag = 'smem constant byte address 0x4 - core index']
  #allocation1 [shape = 'u32[144,128]{1,0:T(1,128)}', space=vmem, size = 0x12000, scoped, tag = 'internal scratch']
  #allocation2 [shape = 'f32[1,1]{1,0:T(1,128)}', space=vmem, size = 0x200, scoped, tag = 'scratch operand']
  %s0 = inlined_call_operand.vmem [shape: f32[8,128], index: 0, kind: input, shape index: {}]
  %s1 = inlined_call_operand.vmem [shape: f32[8,2], index: 1, kind: input, shape index: {}]
  %s2 = inlined_call_operand.hbm [shape: f32[8,128], index: 2, kind: output, shape index: {}]
  %s3 = sld [smem:[#allocation0]]
  $region26: #{tpu_custom_call.1} parent=0
    _
  %s5 = ssub.s32 1, %s3
  %s6 = scalar_select 0, %s5, %s3
  $region1: #{tpu_custom_call.1} parent=0
    #allocation3 [shape = 'u8[4096]{0}', space=vmem, size = 0x1000, scoped, tag = 'output window, operand 0, single buffered']
    #allocation4 [shape = 's32[1]{0}', space=sflag, size = 0x4, scoped, tag = 'scoped memory for tpu_custom_call.1']
    %7 = vsyncpa [#allocation4], 0
    // Predicated region
    $region2: #{tpu_custom_call.1} parent=1 // pred_check
      _
    $region3: #{tpu_custom_call.1} parent=1 // pred_check_branch
      %9 = sbr.rel (0) target = $region5
    $region4: #{tpu_custom_call.1} parent=1 // pred_region
      %s10 = sadd.s32 0, 0
      %p11 = scmp.lt.s32.totalorder %s10, 0
      %s12 = scalar_select %p11, %s10, 0
      %s13 = smul.addr %s12, 8
      %s14 = scalar_lea.vmem %s0, %s13
      %s15 = sadd.s32 0, 0
    $region5: #{tpu_custom_call.1} parent=1 // pred_fallthru
      _
    // Predicated region
    $region6: #{tpu_custom_call.1} parent=1 // pred_check
      _
    $region7: #{tpu_custom_call.1} parent=1 // pred_check_branch
      %17 = sbr.rel (0) target = $region9
    $region8: #{tpu_custom_call.1} parent=1 // pred_region
      %s18 = sadd.s32 0, 0
      %p19 = scmp.lt.s32.totalorder %s18, 0
      %s20 = scalar_select %p19, %s18, 0
      %s21 = smul.addr %s20, 8
      %s22 = scalar_lea.vmem %s1, %s21
      %s23 = sadd.s32 0, 0
    $region9: #{tpu_custom_call.1} parent=1 // pred_fallthru
      _
    %s24 = sadd.s32 0, 0
    %p25 = scmp.lt.s32.totalorder %s24, 0
    %s26 = scalar_select %p25, %s24, 0
    %s27 = smul.addr %s26, 8
    %s28 = scalar_lea.vmem %s0, %s27
    %s29 = sadd.s32 0, 0
    %p30 = scmp.lt.s32.totalorder %s29, 0
    %s31 = scalar_select %p30, %s29, 0
    %s32 = smul.addr %s31, 8
    %s33 = scalar_lea.vmem %s1, %s32
    %s34 = sadd.s32 0, 0
    %p35 = scmp.lt.s32.totalorder %s34, 0
    %s36 = scalar_select %p35, %s34, 0
    %s37 = smul.addr %s36, 8
    %s38 = scalar_lea.vmem %s0, %s37
    %s39 = sadd.s32 0, 0
    %s40 = sadd.s32 0, 0
    %p41 = scmp.lt.s32.totalorder %s40, 0
    %s42 = scalar_select %p41, %s40, 0
    %s43 = smul.addr %s42, 8
    %s44 = scalar_lea.vmem %s1, %s43
    %s45 = sadd.s32 0, 0
    %p46 = scmp.eq.s32.totalorder 0, 0
    // Predicated region
    $region10: #{tpu_custom_call.1} parent=1 // pred_check
      %p47 = pneg %p46
    $region11: #{tpu_custom_call.1} parent=1 // pred_check_branch
      %49 = sbr.rel (%p47) target = $region13
    $region12: #{tpu_custom_call.1} parent=1 // pred_region
      %vm50 = vcmask 0
      %51 = vst.msk [vmem:[#allocation2] sm:$0x1] %vm50, 0.0
    $region13: #{tpu_custom_call.1} parent=1 // pred_fallthru
      _
    %v52 = vld [vmem:[%s38] sm:$0xff]
    %53 = vmax.xlane.f32.xlu0 %v52
    %v54 = vpop.xlane.xlu0 %53
    %v55 = vsub.f32 %v52, %v54
    %v56 = vmul.f32 %v55, 1.442695
    %v57 = vpow.pop %v56
    %58 = vadd.xlane.f32.xlu0 %v57
    %v59 = vpop.xlane.xlu0 %58
    %v60 = vlog2.pop %v59
    %v61 = vmul.f32 %v60, 0.6931472
    %v62 = vadd.f32 %v61, %v54
    %v63 = vld [vmem:[%s44] sm:$0xff]
    %v64 = vlaneseq
    %v65 = vand.u32 %v64, 127
    %vm66 = vcmp.eq.s32.totalorder %v65, 0
    %v67 = vsel %vm66, %v63, 0.0
    %vm68 = vcmask 15360
    %v69 = vsel %vm68, %v67, 0.0
    %70 = vadd.xlane.f32.xlu0 %v69
    %v71 = vpop.xlane.xlu0 %70
    %vm72 = vcmp.eq.s32.totalorder %v65, 1
    %v73 = vsel %vm72, %v63, 0.0
    %v74 = vsel %vm68, %v73, 0.0
    %75 = vadd.xlane.f32.xlu0 %v74
    %v76 = vpop.xlane.xlu0 %75
    %v77 = vsub.f32 %v62, %v71
    %v78 = vmul.f32 %v77, %v76
    %v79 = vsub.f32 0.0, %v78
    %v80 = vmul.f32 %v79, 1.442695
    %v81 = vpow.pop %v80
    %v82 = vsub.f32 1.0, %v81
    %v83 = vmax.f32 %v82, 0.0
    %v84 = vmul.f32 %v83, %v83
    %v85 = vmul.f32 %v84, %v78
    %v86 = vld [vmem:[#allocation2] sm:$0x1]
    %v87 = vrot.slane %v85, 4
    %v88 = vadd.f32 %v85, %v87
    %v89 = vrot.slane %v88, 2
    %v90 = vadd.f32 %v88, %v89
    %v91 = vrot.slane %v90, 1
    %v92 = vadd.f32 %v90, %v91
    %v93 = vadd.f32 %v86, %v92
    %vm94 = vcmask 0
    %95 = vst.msk [vmem:[#allocation2] sm:$0x1] %vm94, %v93
    // Predicated region
    $region14: #{tpu_custom_call.1} parent=1 // pred_check
      %p96 = pneg %p46
    $region15: #{tpu_custom_call.1} parent=1 // pred_check_branch
      %98 = sbr.rel (%p96) target = $region17
    $region16: #{tpu_custom_call.1} parent=1 // pred_region
      %v99 = vld [vmem:[#allocation2] sm:$0x1]
      %v101 = vlaneseq
      %v102 = vshrl.u32 %v101, 7
      %v103 = vsub.s32 0, %v102
      %v104 = vrot.slane %v99, %v103
      %105 = vset.pattern.permute.xlu0 0
      %106 = vperm.xlu0 %105, %v104
      %v107 = vpop.permute.xlu0 %106
      %109 = vst [vmem:[#allocation3] sm:$0xff] %v107
    $region17: #{tpu_custom_call.1} parent=1 // pred_fallthru
      _
    // Predicated region
    $region18: #{tpu_custom_call.1} parent=1 // pred_check
      _
    $region19: #{tpu_custom_call.1} parent=1 // pred_check_branch
      %111 = sbr.rel (0) target = $region21
    $region20: #{tpu_custom_call.1} parent=1 // pred_region
      %s113 = ssub.s32 128, 128
      %114 = vsyncadd [#allocation4], %s113
      %s116 = sshll.u32 [#allocation3], 4
      %s117 = int_to_ptr.vmem [resolvable:$true] %s116
      %119 = dma.vmem_to_hbm [thread:$0]  %s117, 128, %s2, [#allocation4]
    $region21: #{tpu_custom_call.1} parent=1 // pred_fallthru
      _
    // Predicated region
    $region22: #{tpu_custom_call.1} parent=1 // pred_check
      _
    $region23: #{tpu_custom_call.1} parent=1 // pred_check_branch
      %121 = sbr.rel (0) target = $region25
    $region24: #{tpu_custom_call.1} parent=1 // pred_region
      %122 = dma.done [#allocation4], 128
    $region25: #{tpu_custom_call.1} parent=1 // pred_fallthru
      _
    %123 = vsyncpa [#allocation4], 1

</llo_original>
